<compile_context>
chip_gen: v7x
topology: tpu7x:2x2x1
jax: 0.10.0
libtpu: 0.0.40
codegen_flags: <defaults>
</compile_context>

<pallas_src>
import functools

import numpy as np
import jax
import jax.numpy as jnp
from jax.experimental import pallas as pl
from jax.experimental.pallas import tpu as pltpu

LAM = 0.01  # dc.lam in the reference module


# ----------------------------------------------------------------------------
# Small helpers
# ----------------------------------------------------------------------------
def _grid_blocks(batch):
    """Number of grid steps: 1 on single-TC parts (v5e/v6e), up to 2 on v7x."""
    try:
        kind = jax.devices()[0].device_kind.lower()
    except Exception:
        kind = ""
    cores = 2 if "v7" in kind else 1
    g = max(1, min(cores, batch))
    while batch % g:
        g -= 1
    return g


# ----------------------------------------------------------------------------
# Shared in-kernel math
# ----------------------------------------------------------------------------
def _my_cg(rhs, ata_t):
    """The (non-standard) 5-step myCG recursion from the PyTorch reference.

    rhs:   (R, P) rows, one CG problem per row (per batch element)
    ata_t: (P, P) transpose of AtA = iradon(radon(.)) + lam*I

    Mirrors the reference exactly: rsold/rsnew are elementwise r*r, alpha and
    beta are ratios of *Frobenius norms* of elementwise products, and the
    tolerance `break` is emulated with a per-row `done` mask.  norm(rsold) is
    carried from the previous step's norm(rsnew) (same value) to shorten the
    serial reduction chain.  Exact divide is used (not approx reciprocal).
    """

    def A_apply(v):                       # (R, P) @ (P, P)
        return jnp.dot(v, ata_t, preferred_element_type=jnp.float32)

    def fro(v):                           # per-row Frobenius norm -> (R, 1)
        return jnp.sqrt(jnp.sum(v * v, axis=-1, keepdims=True))

    x = jnp.zeros_like(rhs)
    r = rhs                               # r = rhs - A(0), and A(0) == 0 exactly
    p = r
    rsold_n = fro(r * r)                  # norm(rsold), carried across steps
    done = jnp.zeros((rhs.shape[0], 1), dtype=jnp.bool_)   # emulates `break`
    for _ in range(5):
        Ap = A_apply(p)
        alpha = rsold_n / fro(p * Ap)
        x_new = x + alpha * p
        r_new = r - alpha * Ap
        rsnew_n = fro(r_new * r_new)
        hit_tol = rsnew_n < 1e-10
        beta = rsnew_n / rsold_n
        p_new = r_new + beta * p

        x = jnp.where(done, x, x_new)
        r = jnp.where(done, r, r_new)
        stop = jnp.logical_or(done, hit_tol)
        p = jnp.where(stop, p, p_new)
        rsold_n = jnp.where(stop, rsold_n, rsnew_n)
        done = stop
    return x


# ----------------------------------------------------------------------------
# Pallas kernels
# ----------------------------------------------------------------------------
def dc_batched_kernel(z_ref, b_ref, ata_ref, bmat_ref, o_ref):
    """Standalone dc.forward(zk, b) for one block of Bc batch rows.

    z_ref:    (1, Bc, P)  flattened zk images
    b_ref:    (1, Bc, S)  flattened sinograms (S = N * n_angles)
    ata_ref:  (P, P)      transpose of AtA
    bmat_ref: (S, P)      transpose of the iradon (backprojection) matrix
    o_ref:    (1, Bc, P)  xk output
    """
    # rhs_base = iradon(b): one (Bc,S)@(S,P) matmul, done once.
    atb = jnp.dot(b_ref[0], bmat_ref[...], preferred_element_type=jnp.float32)
    rhs = atb + LAM * z_ref[0]
    o_ref[0] = _my_cg(rhs, ata_ref[...]).astype(o_ref.dtype)


def modl_fused_kernel(x0_ref, b_ref, ata_ref, bmat_ref, masks_ref,
                      w0_ref, wmid_ref, wlast_ref, o_ref,
                      l0_scr, tap_scr, wide_scr, rows_scr, *, niter, n):
    """MoDL forward for Bc batch images: NITER x (dw + dc), fully fused.

    dw activations live as (C, Bc*P): channels on sublanes, pixels of the
    Bc lane-concatenated images on the lane axis.  A 3x3 tap = one static
    lane roll + boundary mask (masks also zero the inter-image wrap lanes).
    CG state lives as (Bc, P) rows, so A_apply is one MXU matmul.
    """
    bc = x0_ref.shape[1]
    p = n * n
    wp = bc * p
    feat = wmid_ref.shape[1]
    n_mid = wmid_ref.shape[0]
    # tap k <-> offset (dy, dx) = (k//3 - 1, k%3 - 1); rolled[q] = act[q + off]
    shifts = [(-((k // 3 - 1) * n + (k % 3 - 1))) % wp for k in range(9)]
    ata_t = ata_ref[...]                                    # VMEM resident

    # Rows 9..15 of the layer-0 tap stack stay zero forever.  They are only
    # multiplied by the zero-padded columns of w0, but 0*garbage must not NaN,
    # so zero them once per kernel invocation.
    l0_scr[...] = jnp.zeros_like(l0_scr)

    def tap(act, k):
        if shifts[k] == 0:                # centre tap: no roll, mask == 1
            return act
        return pltpu.roll(act, shifts[k], axis=1) * masks_ref[k]

    def dw(x_wide):
        # layer 0: 1 -> F, ONE (F,16)@(16,wp) dot over the stacked taps
        for k in range(9):
            l0_scr[k:k + 1, :] = tap(x_wide, k)
        act = jnp.maximum(
            jnp.dot(w0_ref[...], l0_scr[...],
                    preferred_element_type=jnp.float32), 0.0)
        # middle layers: F -> F, ONE (F,9F)@(9F,wp) dot each
        for l in range(n_mid):
            for k in range(9):
                tap_scr[k * feat:(k + 1) * feat, :] = tap(act, k)
            act = jnp.maximum(
                jnp.dot(wmid_ref[l], tap_scr[...],
                        preferred_element_type=jnp.float32), 0.0)
        # last layer: F -> 1, ONE (1,9F)@(9F,wp) dot, un-activated (review note)
        for k in range(9):
            tap_scr[k * feat:(k + 1) * feat, :] = tap(act, k)
        y = jnp.dot(wlast_ref[...], tap_scr[...],
                    preferred_element_type=jnp.float32)      # (1, wp)
        return x_wide + y                                    # residual

    def rows_to_wide(xr):                 # (bc, p) -> (1, wp), via VMEM staging
        if bc == 1:
            return xr
        for i in range(bc):
            wide_scr[:, i * p:(i + 1) * p] = xr[i:i + 1, :]
        return wide_scr[...]

    def wide_to_rows(xw):                 # (1, wp) -> (bc, p), via VMEM staging
        if bc == 1:
            return xw
        for i in range(bc):
            rows_scr[i:i + 1, :] = xw[:, i * p:(i + 1) * p]
        return rows_scr[...]

    # rhs_base = iradon(b): computed once per forward, before the NITER loop.
    atb = jnp.dot(b_ref[0], bmat_ref[...], preferred_element_type=jnp.float32)

    xk = x0_ref[0]                        # (bc, p) rows
    # NITER is small (2) so a Python unroll is fine; for larger NITER switch
    # to lax.fori_loop to bound vreg live ranges / compile time (review note).
    for _ in range(niter):
        zk = dw(rows_to_wide(xk))                    # (1, wp)
        xk = _my_cg(atb + LAM * wide_to_rows(zk), ata_t)
    o_ref[0] = xk.astype(o_ref.dtype)


# ----------------------------------------------------------------------------
# Pallas wrappers
# ----------------------------------------------------------------------------
def dc_forward(zk, b, ata_t, bmat_t):
    """The spec module: dc.forward(zk, b).  Batched CG per grid step."""
    B = zk.shape[0]
    P = ata_t.shape[0]
    S = bmat_t.shape[0]
    G = _grid_blocks(B)          # 1 on v5e/v6e, batch split across TCs on v7x
    Bc = B // G
    z3 = zk.reshape(G, Bc, P).astype(jnp.float32)
    b3 = b.reshape(G, Bc, S).astype(jnp.float32)
    out = pl.pallas_call(
        dc_batched_kernel,
        out_shape=jax.ShapeDtypeStruct((G, Bc, P), jnp.float32),
        grid=(G,),
        in_specs=[
            pl.BlockSpec((1, Bc, P), lambda i: (i, 0, 0)),
            pl.BlockSpec((1, Bc, S), lambda i: (i, 0, 0)),
            pl.BlockSpec((P, P), lambda i: (0, 0)),
            pl.BlockSpec((S, P), lambda i: (0, 0)),
        ],
        out_specs=pl.BlockSpec((1, Bc, P), lambda i: (i, 0, 0)),
        compiler_params=pltpu.CompilerParams(
            dimension_semantics=("parallel",)),
    )(z3, b3, ata_t, bmat_t)
    return out.reshape(zk.shape)


def modl_forward(x0, b, w0p, wmid, wlast, ata_t, bmat_t, niter):
    """Full MoDL forward (NITER x (dw + dc)) in ONE pallas_call."""
    B = x0.shape[0]
    n = x0.shape[-1]
    P = n * n
    S = b.shape[-2] * b.shape[-1]
    feat = wmid.shape[1]
    G = _grid_blocks(B)
    Bc = B // G
    WP = Bc * P
    masks = jnp.asarray(build_tap_masks(n, Bc))            # (9, 1, WP)
    x3 = x0.reshape(G, Bc, P).astype(jnp.float32)
    b3 = b.reshape(G, Bc, S).astype(jnp.float32)

    kern = functools.partial(modl_fused_kernel, niter=niter, n=n)
    out = pl.pallas_call(
        kern,
        out_shape=jax.ShapeDtypeStruct((G, Bc, P), jnp.float32),
        grid=(G,),
        in_specs=[
            pl.BlockSpec((1, Bc, P), lambda i: (i, 0, 0)),      # x0 rows
            pl.BlockSpec((1, Bc, S), lambda i: (i, 0, 0)),      # b rows
            pl.BlockSpec((P, P), lambda i: (0, 0)),             # AtA^T (resident)
            pl.BlockSpec((S, P), lambda i: (0, 0)),             # iradon^T (resident)
            pl.BlockSpec((9, 1, WP), lambda i: (0, 0, 0)),      # tap masks
            pl.BlockSpec((feat, 16), lambda i: (0, 0)),         # layer-0 weight (padded)
            pl.BlockSpec(wmid.shape, lambda i: (0, 0, 0)),      # (n_mid, F, 9F)
            pl.BlockSpec((1, 9 * feat), lambda i: (0, 0)),      # last-layer weight
        ],
        out_specs=pl.BlockSpec((1, Bc, P), lambda i: (i, 0, 0)),
        scratch_shapes=[
            pltpu.VMEM((16, WP), jnp.float32),         # layer-0 tap stack
            pltpu.VMEM((9 * feat, WP), jnp.float32),   # middle/last tap stack
            pltpu.VMEM((1, WP), jnp.float32),          # rows -> wide staging
            pltpu.VMEM((Bc, P), jnp.float32),          # wide -> rows staging
        ],
        compiler_params=pltpu.CompilerParams(
            dimension_semantics=("parallel",)),
    )(x3, b3, ata_t, bmat_t, masks, w0p, wmid, wlast)
    return out.reshape(x0.shape)


# ----------------------------------------------------------------------------
# Deterministic construction of the (approximate) radon / iradon operators
# ----------------------------------------------------------------------------
def build_radon_matrix(n, thetas_deg):
    """Dense bilinear-rotation radon operator, circle=True.

    Rows are indexed d * n_ang + ti so that R @ img_flat equals the row-major
    flattening of a (n_det, n_angles) sinogram.
    """
    center = (n - 1) / 2.0
    radius2 = (n / 2.0) ** 2
    n_ang = len(thetas_deg)
    R = np.zeros((n * n_ang, n * n), dtype=np.float64)
    for ti, th in enumerate(thetas_deg):
        a = np.deg2rad(th)
        ca, sa = np.cos(a), np.sin(a)
        for d in range(n):                   # detector bin
            xo = d - center
            for s in range(n):               # integration variable
                yo = s - center
                if xo * xo + yo * yo > radius2:
                    continue
                xi = ca * xo + sa * yo + center
                yi = -sa * xo + ca * yo + center
                x0f, y0f = int(np.floor(xi)), int(np.floor(yi))
                for yy in (y0f, y0f + 1):
                    for xx in (x0f, x0f + 1):
                        if 0 <= yy < n and 0 <= xx < n:
                            w = (1.0 - abs(xi - xx)) * (1.0 - abs(yi - yy))
                            if w > 0.0:
                                R[d * n_ang + ti, yy * n + xx] += w
    return R


def build_iradon_matrix(n, n_ang, R):
    """Ramp-filtered backprojection as a dense linear map (iradon approx)."""
    freqs = np.fft.fftfreq(n)
    ramp = 2.0 * np.abs(freqs)
    F = np.fft.fft(np.eye(n), axis=0)
    Finv = np.fft.ifft(np.eye(n), axis=0)
    filt = np.real(Finv @ np.diag(ramp) @ F)          # (n_det, n_det)
    filt_big = np.kron(filt, np.eye(n_ang))           # acts on flat d*n_ang+ti
    scale = np.pi / (2.0 * n_ang)
    return scale * (R.T @ filt_big)                   # (n*n, n*n_ang)


def build_tap_masks(n, bc):
    """Zero-padding validity masks for the 9 conv taps, tiled over the bc
    lane-concatenated images: (9, 1, bc*n*n) float32.  The inter-image (and
    global) wrap positions of the lane roll are exactly the positions these
    masks already zero, so images never mix."""
    m = np.zeros((9, 1, n * n), np.float32)
    for k in range(9):
        dy, dx = k // 3 - 1, k % 3 - 1
        for h in range(n):
            for w in range(n):
                if 0 <= h + dy < n and 0 <= w + dx < n:
                    m[k, 0, h * n + w] = 1.0
    return np.tile(m, (1, 1, bc))


# ----------------------------------------------------------------------------
if __name__ == "__main__":
    B, N, NANG, FEAT, NITER = 2, 16, 8, 64, 2

    thetas = np.linspace(0.0, 180.0, NANG, endpoint=False)
    R = build_radon_matrix(N, thetas)
    Bmat = build_iradon_matrix(N, NANG, R)
    ata = Bmat @ R + LAM * np.eye(N * N)
    ata_t = jnp.asarray(ata.T, jnp.float32)              # (256, 256)
    bmat_t = jnp.asarray(Bmat.T, jnp.float32)             # (128, 256)

    key = jax.random.PRNGKey(0)
    ks = jax.random.split(key, 6)

    # conv weights in "stacked-tap" form (column index = k*F + f_in):
    #   layer 0   : (F, 9) padded to (F, 16)   1 -> 64
    #   layers 1-3: (3, F, 9F)                 64 -> 64
    #   layer 4   : (1, 9F)                    64 -> 1
    w0p = jnp.pad(0.30 * jax.random.normal(ks[0], (FEAT, 9), jnp.float32),
                  ((0, 0), (0, 7)))
    wmid = 0.05 * jax.random.normal(ks[1], (3, FEAT, 9 * FEAT), jnp.float32)
    wlast = 0.05 * jax.random.normal(ks[2], (1, 9 * FEAT), jnp.float32)

    x0 = jax.random.normal(ks[3], (B, 1, N, N), jnp.float32)      # image
    b = jax.random.normal(ks[4], (B, 1, N, NANG), jnp.float32)    # sinogram

    # --- standalone dc.forward(zk, b) (the spec module) ----------------------
    dc_fn = jax.jit(lambda z_, b_: dc_forward(z_, b_, ata_t, bmat_t))
    dc_out = dc_fn(x0, b)
    jax.block_until_ready(dc_out)
    assert dc_out.shape == (B, 1, N, N)
    assert bool(jnp.all(jnp.isfinite(dc_out)))

    # --- fully fused MoDL forward (NITER x (dw + dc)) -------------------------
    fwd = jax.jit(lambda x0_, b_: modl_forward(
        x0_, b_, w0p, wmid, wlast, ata_t, bmat_t, NITER))
    out = fwd(x0, b)
    jax.block_until_ready(out)
    assert out.shape == (B, 1, N, N)
    assert bool(jnp.all(jnp.isfinite(out)))

    print("KERNEL_OK")
</pallas_src>

<mosaic_0001>
module attributes {stable_mosaic.version = 11 : i64} {
  func.func @dc_batched_kernel(%arg0: i32, %arg1: memref<1x2x256xf32, #tpu.memory_space<vmem>>, %arg2: memref<1x2x128xf32, #tpu.memory_space<vmem>>, %arg3: memref<256x256xf32, #tpu.memory_space<vmem>>, %arg4: memref<128x256xf32, #tpu.memory_space<vmem>>, %arg5: memref<1x2x256xf32, #tpu.memory_space<vmem>>) attributes {dimension_semantics = [#tpu.dimension_semantics<parallel>], iteration_bounds = array<i64: 1>, scalar_prefetch = 0 : i64, scratch_operands = 0 : i64, tpu.core_type = #tpu.core_type<tc>, window_params = [{transform_indices = @transform_0, window_bounds = array<i64: 1, 2, 256>}, {transform_indices = @transform_1, window_bounds = array<i64: 1, 2, 128>}, {pipeline_mode = #tpu.pipeline_mode<synchronous>, transform_indices = @transform_2, window_bounds = array<i64: 256, 256>}, {pipeline_mode = #tpu.pipeline_mode<synchronous>, transform_indices = @transform_3, window_bounds = array<i64: 128, 256>}, {transform_indices = @transform_4, window_bounds = array<i64: 1, 2, 256>}]} {
    %c0 = arith.constant 0 : index
    %c0_0 = arith.constant 0 : index
    %c0_1 = arith.constant 0 : index
    %0 = vector.load %arg2[%c0, %c0_0, %c0_1] : memref<1x2x128xf32, #tpu.memory_space<vmem>>, vector<1x2x128xf32>
    %1 = vector.shape_cast %0 : vector<1x2x128xf32> to vector<2x128xf32>
    %c0_2 = arith.constant 0 : index
    %c0_3 = arith.constant 0 : index
    %2 = vector.load %arg4[%c0_2, %c0_3] : memref<128x256xf32, #tpu.memory_space<vmem>>, vector<128x256xf32>
    %cst = arith.constant dense<0.000000e+00> : vector<2x256xf32>
    %3 = tpu.matmul %1, %2, %cst {dimension_numbers = #tpu.dot_dimension_numbers<[1], [0], [0], [1], [0, 0, 1, 1], [], []>} : vector<2x128xf32>, vector<128x256xf32>, vector<2x256xf32> -> vector<2x256xf32>
    %c0_4 = arith.constant 0 : index
    %c0_5 = arith.constant 0 : index
    %c0_6 = arith.constant 0 : index
    %4 = vector.load %arg1[%c0_4, %c0_5, %c0_6] : memref<1x2x256xf32, #tpu.memory_space<vmem>>, vector<1x2x256xf32>
    %5 = vector.shape_cast %4 : vector<1x2x256xf32> to vector<2x256xf32>
    %cst_7 = arith.constant 0.00999999977 : f32
    %6 = vector.broadcast %cst_7 : f32 to vector<2x256xf32>
    %7 = arith.mulf %6, %5 : vector<2x256xf32>
    %8 = arith.addf %3, %7 : vector<2x256xf32>
    %c0_8 = arith.constant 0 : index
    %c0_9 = arith.constant 0 : index
    %9 = vector.load %arg3[%c0_8, %c0_9] : memref<256x256xf32, #tpu.memory_space<vmem>>, vector<256x256xf32>
    %cst_10 = arith.constant 0.000000e+00 : f32
    %10 = vector.broadcast %cst_10 : f32 to vector<2x256xf32>
    %11 = arith.mulf %8, %8 : vector<2x256xf32>
    %12 = arith.mulf %11, %11 : vector<2x256xf32>
    %cst_11 = arith.constant dense<0.000000e+00> : vector<2xf32>
    %13 = vector.multi_reduction <add>, %12, %cst_11 [1] : vector<2x256xf32> to vector<2xf32>
    %14 = vector.shape_cast %13 : vector<2xf32> to vector<2x1xf32>
    %15 = math.sqrt %14 : vector<2x1xf32>
    %false = arith.constant false
    %16 = vector.broadcast %false : i1 to vector<2x1xi1>
    %cst_12 = arith.constant dense<0.000000e+00> : vector<2x256xf32>
    %17 = tpu.matmul %8, %9, %cst_12 {dimension_numbers = #tpu.dot_dimension_numbers<[1], [0], [0], [1], [0, 0, 1, 1], [], []>} : vector<2x256xf32>, vector<256x256xf32>, vector<2x256xf32> -> vector<2x256xf32>
    %18 = arith.mulf %8, %17 : vector<2x256xf32>
    %19 = arith.mulf %18, %18 : vector<2x256xf32>
    %cst_13 = arith.constant dense<0.000000e+00> : vector<2xf32>
    %20 = vector.multi_reduction <add>, %19, %cst_13 [1] : vector<2x256xf32> to vector<2xf32>
    %21 = vector.shape_cast %20 : vector<2xf32> to vector<2x1xf32>
    %22 = math.sqrt %21 : vector<2x1xf32>
    %23 = arith.divf %15, %22 : vector<2x1xf32>
    %24 = vector.broadcast %23 : vector<2x1xf32> to vector<2x256xf32>
    %25 = arith.mulf %24, %8 : vector<2x256xf32>
    %26 = arith.addf %10, %25 : vector<2x256xf32>
    %27 = vector.broadcast %23 : vector<2x1xf32> to vector<2x256xf32>
    %28 = arith.mulf %27, %17 : vector<2x256xf32>
    %29 = arith.subf %8, %28 : vector<2x256xf32>
    %30 = arith.mulf %29, %29 : vector<2x256xf32>
    %31 = arith.mulf %30, %30 : vector<2x256xf32>
    %cst_14 = arith.constant dense<0.000000e+00> : vector<2xf32>
    %32 = vector.multi_reduction <add>, %31, %cst_14 [1] : vector<2x256xf32> to vector<2xf32>
    %33 = vector.shape_cast %32 : vector<2xf32> to vector<2x1xf32>
    %34 = math.sqrt %33 : vector<2x1xf32>
    %cst_15 = arith.constant 1.000000e-10 : f32
    %35 = vector.broadcast %cst_15 : f32 to vector<2x1xf32>
    %36 = arith.cmpf olt, %34, %35 : vector<2x1xf32>
    %37 = arith.divf %34, %15 : vector<2x1xf32>
    %38 = vector.broadcast %37 : vector<2x1xf32> to vector<2x256xf32>
    %39 = arith.mulf %38, %8 : vector<2x256xf32>
    %40 = arith.addf %29, %39 : vector<2x256xf32>
    %41 = vector.shape_cast %16 : vector<2x1xi1> to vector<2x1xi1>
    %42 = vector.broadcast %41 : vector<2x1xi1> to vector<2x256xi1>
    %43 = arith.select %42, %10, %26 : vector<2x256xi1>, vector<2x256xf32>
    %44 = vector.shape_cast %16 : vector<2x1xi1> to vector<2x1xi1>
    %45 = vector.broadcast %44 : vector<2x1xi1> to vector<2x256xi1>
    %46 = arith.select %45, %8, %29 : vector<2x256xi1>, vector<2x256xf32>
    %47 = arith.ori %16, %36 : vector<2x1xi1>
    %48 = vector.shape_cast %47 : vector<2x1xi1> to vector<2x1xi1>
    %49 = vector.broadcast %48 : vector<2x1xi1> to vector<2x256xi1>
    %50 = arith.select %49, %8, %40 : vector<2x256xi1>, vector<2x256xf32>
    %51 = arith.select %47, %15, %34 : vector<2x1xi1>, vector<2x1xf32>
    %cst_16 = arith.constant dense<0.000000e+00> : vector<2x256xf32>
    %52 = tpu.matmul %50, %9, %cst_16 {dimension_numbers = #tpu.dot_dimension_numbers<[1], [0], [0], [1], [0, 0, 1, 1], [], []>} : vector<2x256xf32>, vector<256x256xf32>, vector<2x256xf32> -> vector<2x256xf32>
    %53 = arith.mulf %50, %52 : vector<2x256xf32>
    %54 = arith.mulf %53, %53 : vector<2x256xf32>
    %cst_17 = arith.constant dense<0.000000e+00> : vector<2xf32>
    %55 = vector.multi_reduction <add>, %54, %cst_17 [1] : vector<2x256xf32> to vector<2xf32>
    %56 = vector.shape_cast %55 : vector<2xf32> to vector<2x1xf32>
    %57 = math.sqrt %56 : vector<2x1xf32>
    %58 = arith.divf %51, %57 : vector<2x1xf32>
    %59 = vector.broadcast %58 : vector<2x1xf32> to vector<2x256xf32>
    %60 = arith.mulf %59, %50 : vector<2x256xf32>
    %61 = arith.addf %43, %60 : vector<2x256xf32>
    %62 = vector.broadcast %58 : vector<2x1xf32> to vector<2x256xf32>
    %63 = arith.mulf %62, %52 : vector<2x256xf32>
    %64 = arith.subf %46, %63 : vector<2x256xf32>
    %65 = arith.mulf %64, %64 : vector<2x256xf32>
    %66 = arith.mulf %65, %65 : vector<2x256xf32>
    %cst_18 = arith.constant dense<0.000000e+00> : vector<2xf32>
    %67 = vector.multi_reduction <add>, %66, %cst_18 [1] : vector<2x256xf32> to vector<2xf32>
    %68 = vector.shape_cast %67 : vector<2xf32> to vector<2x1xf32>
    %69 = math.sqrt %68 : vector<2x1xf32>
    %cst_19 = arith.constant 1.000000e-10 : f32
    %70 = vector.broadcast %cst_19 : f32 to vector<2x1xf32>
    %71 = arith.cmpf olt, %69, %70 : vector<2x1xf32>
    %72 = arith.divf %69, %51 : vector<2x1xf32>
    %73 = vector.broadcast %72 : vector<2x1xf32> to vector<2x256xf32>
    %74 = arith.mulf %73, %50 : vector<2x256xf32>
    %75 = arith.addf %64, %74 : vector<2x256xf32>
    %76 = vector.shape_cast %47 : vector<2x1xi1> to vector<2x1xi1>
    %77 = vector.broadcast %76 : vector<2x1xi1> to vector<2x256xi1>
    %78 = arith.select %77, %43, %61 : vector<2x256xi1>, vector<2x256xf32>
    %79 = vector.shape_cast %47 : vector<2x1xi1> to vector<2x1xi1>
    %80 = vector.broadcast %79 : vector<2x1xi1> to vector<2x256xi1>
    %81 = arith.select %80, %46, %64 : vector<2x256xi1>, vector<2x256xf32>
    %82 = arith.ori %47, %71 : vector<2x1xi1>
    %83 = vector.shape_cast %82 : vector<2x1xi1> to vector<2x1xi1>
    %84 = vector.broadcast %83 : vector<2x1xi1> to vector<2x256xi1>
    %85 = arith.select %84, %50, %75 : vector<2x256xi1>, vector<2x256xf32>
    %86 = arith.select %82, %51, %69 : vector<2x1xi1>, vector<2x1xf32>
    %cst_20 = arith.constant dense<0.000000e+00> : vector<2x256xf32>
    %87 = tpu.matmul %85, %9, %cst_20 {dimension_numbers = #tpu.dot_dimension_numbers<[1], [0], [0], [1], [0, 0, 1, 1], [], []>} : vector<2x256xf32>, vector<256x256xf32>, vector<2x256xf32> -> vector<2x256xf32>
    %88 = arith.mulf %85, %87 : vector<2x256xf32>
    %89 = arith.mulf %88, %88 : vector<2x256xf32>
    %cst_21 = arith.constant dense<0.000000e+00> : vector<2xf32>
    %90 = vector.multi_reduction <add>, %89, %cst_21 [1] : vector<2x256xf32> to vector<2xf32>
    %91 = vector.shape_cast %90 : vector<2xf32> to vector<2x1xf32>
    %92 = math.sqrt %91 : vector<2x1xf32>
    %93 = arith.divf %86, %92 : vector<2x1xf32>
    %94 = vector.broadcast %93 : vector<2x1xf32> to vector<2x256xf32>
    %95 = arith.mulf %94, %85 : vector<2x256xf32>
    %96 = arith.addf %78, %95 : vector<2x256xf32>
    %97 = vector.broadcast %93 : vector<2x1xf32> to vector<2x256xf32>
    %98 = arith.mulf %97, %87 : vector<2x256xf32>
    %99 = arith.subf %81, %98 : vector<2x256xf32>
    %100 = arith.mulf %99, %99 : vector<2x256xf32>
    %101 = arith.mulf %100, %100 : vector<2x256xf32>
    %cst_22 = arith.constant dense<0.000000e+00> : vector<2xf32>
    %102 = vector.multi_reduction <add>, %101, %cst_22 [1] : vector<2x256xf32> to vector<2xf32>
    %103 = vector.shape_cast %102 : vector<2xf32> to vector<2x1xf32>
    %104 = math.sqrt %103 : vector<2x1xf32>
    %cst_23 = arith.constant 1.000000e-10 : f32
    %105 = vector.broadcast %cst_23 : f32 to vector<2x1xf32>
    %106 = arith.cmpf olt, %104, %105 : vector<2x1xf32>
    %107 = arith.divf %104, %86 : vector<2x1xf32>
    %108 = vector.broadcast %107 : vector<2x1xf32> to vector<2x256xf32>
    %109 = arith.mulf %108, %85 : vector<2x256xf32>
    %110 = arith.addf %99, %109 : vector<2x256xf32>
    %111 = vector.shape_cast %82 : vector<2x1xi1> to vector<2x1xi1>
    %112 = vector.broadcast %111 : vector<2x1xi1> to vector<2x256xi1>
    %113 = arith.select %112, %78, %96 : vector<2x256xi1>, vector<2x256xf32>
    %114 = vector.shape_cast %82 : vector<2x1xi1> to vector<2x1xi1>
    %115 = vector.broadcast %114 : vector<2x1xi1> to vector<2x256xi1>
    %116 = arith.select %115, %81, %99 : vector<2x256xi1>, vector<2x256xf32>
    %117 = arith.ori %82, %106 : vector<2x1xi1>
    %118 = vector.shape_cast %117 : vector<2x1xi1> to vector<2x1xi1>
    %119 = vector.broadcast %118 : vector<2x1xi1> to vector<2x256xi1>
    %120 = arith.select %119, %85, %110 : vector<2x256xi1>, vector<2x256xf32>
    %121 = arith.select %117, %86, %104 : vector<2x1xi1>, vector<2x1xf32>
    %cst_24 = arith.constant dense<0.000000e+00> : vector<2x256xf32>
    %122 = tpu.matmul %120, %9, %cst_24 {dimension_numbers = #tpu.dot_dimension_numbers<[1], [0], [0], [1], [0, 0, 1, 1], [], []>} : vector<2x256xf32>, vector<256x256xf32>, vector<2x256xf32> -> vector<2x256xf32>
    %123 = arith.mulf %120, %122 : vector<2x256xf32>
    %124 = arith.mulf %123, %123 : vector<2x256xf32>
    %cst_25 = arith.constant dense<0.000000e+00> : vector<2xf32>
    %125 = vector.multi_reduction <add>, %124, %cst_25 [1] : vector<2x256xf32> to vector<2xf32>
    %126 = vector.shape_cast %125 : vector<2xf32> to vector<2x1xf32>
    %127 = math.sqrt %126 : vector<2x1xf32>
    %128 = arith.divf %121, %127 : vector<2x1xf32>
    %129 = vector.broadcast %128 : vector<2x1xf32> to vector<2x256xf32>
    %130 = arith.mulf %129, %120 : vector<2x256xf32>
    %131 = arith.addf %113, %130 : vector<2x256xf32>
    %132 = vector.broadcast %128 : vector<2x1xf32> to vector<2x256xf32>
    %133 = arith.mulf %132, %122 : vector<2x256xf32>
    %134 = arith.subf %116, %133 : vector<2x256xf32>
    %135 = arith.mulf %134, %134 : vector<2x256xf32>
    %136 = arith.mulf %135, %135 : vector<2x256xf32>
    %cst_26 = arith.constant dense<0.000000e+00> : vector<2xf32>
    %137 = vector.multi_reduction <add>, %136, %cst_26 [1] : vector<2x256xf32> to vector<2xf32>
    %138 = vector.shape_cast %137 : vector<2xf32> to vector<2x1xf32>
    %139 = math.sqrt %138 : vector<2x1xf32>
    %cst_27 = arith.constant 1.000000e-10 : f32
    %140 = vector.broadcast %cst_27 : f32 to vector<2x1xf32>
    %141 = arith.cmpf olt, %139, %140 : vector<2x1xf32>
    %142 = arith.divf %139, %121 : vector<2x1xf32>
    %143 = vector.broadcast %142 : vector<2x1xf32> to vector<2x256xf32>
    %144 = arith.mulf %143, %120 : vector<2x256xf32>
    %145 = arith.addf %134, %144 : vector<2x256xf32>
    %146 = vector.shape_cast %117 : vector<2x1xi1> to vector<2x1xi1>
    %147 = vector.broadcast %146 : vector<2x1xi1> to vector<2x256xi1>
    %148 = arith.select %147, %113, %131 : vector<2x256xi1>, vector<2x256xf32>
    %149 = arith.ori %117, %141 : vector<2x1xi1>
    %150 = vector.shape_cast %149 : vector<2x1xi1> to vector<2x1xi1>
    %151 = vector.broadcast %150 : vector<2x1xi1> to vector<2x256xi1>
    %152 = arith.select %151, %120, %145 : vector<2x256xi1>, vector<2x256xf32>
    %153 = arith.select %149, %121, %139 : vector<2x1xi1>, vector<2x1xf32>
    %cst_28 = arith.constant dense<0.000000e+00> : vector<2x256xf32>
    %154 = tpu.matmul %152, %9, %cst_28 {dimension_numbers = #tpu.dot_dimension_numbers<[1], [0], [0], [1], [0, 0, 1, 1], [], []>} : vector<2x256xf32>, vector<256x256xf32>, vector<2x256xf32> -> vector<2x256xf32>
    %155 = arith.mulf %152, %154 : vector<2x256xf32>
    %156 = arith.mulf %155, %155 : vector<2x256xf32>
    %cst_29 = arith.constant dense<0.000000e+00> : vector<2xf32>
    %157 = vector.multi_reduction <add>, %156, %cst_29 [1] : vector<2x256xf32> to vector<2xf32>
    %158 = vector.shape_cast %157 : vector<2xf32> to vector<2x1xf32>
    %159 = math.sqrt %158 : vector<2x1xf32>
    %160 = arith.divf %153, %159 : vector<2x1xf32>
    %161 = vector.broadcast %160 : vector<2x1xf32> to vector<2x256xf32>
    %162 = arith.mulf %161, %152 : vector<2x256xf32>
    %163 = arith.addf %148, %162 : vector<2x256xf32>
    %164 = vector.shape_cast %149 : vector<2x1xi1> to vector<2x1xi1>
    %165 = vector.broadcast %164 : vector<2x1xi1> to vector<2x256xi1>
    %166 = arith.select %165, %148, %163 : vector<2x256xi1>, vector<2x256xf32>
    %c0_30 = arith.constant 0 : index
    %c0_31 = arith.constant 0 : index
    %c0_32 = arith.constant 0 : index
    %167 = vector.load %arg5[%c0_30, %c0_31, %c0_32] : memref<1x2x256xf32, #tpu.memory_space<vmem>>, vector<1x2x256xf32>
    %168 = vector.shape_cast %167 : vector<1x2x256xf32> to vector<2x256xf32>
    %169 = vector.shape_cast %166 : vector<2x256xf32> to vector<1x2x256xf32>
    tpu.vector_store %arg5[%c0_30, %c0_31, %c0_32], %169 {strides = array<i32>} : memref<1x2x256xf32, #tpu.memory_space<vmem>>, vector<1x2x256xf32>,
    return
  }
  func.func @transform_0(%arg0: i32) -> (i32, i32, i32) {
    %c0_i32 = arith.constant 0 : i32
    %c0_i32_0 = arith.constant 0 : i32
    %c0_i32_1 = arith.constant 0 : i32
    return %arg0, %c0_i32, %c0_i32_0 : i32, i32, i32
  }
  func.func @transform_1(%arg0: i32) -> (i32, i32, i32) {
    %c0_i32 = arith.constant 0 : i32
    %c0_i32_0 = arith.constant 0 : i32
    %c0_i32_1 = arith.constant 0 : i32
    return %arg0, %c0_i32, %c0_i32_0 : i32, i32, i32
  }
  func.func @transform_2(%arg0: i32) -> (i32, i32) {
    %c0_i32 = arith.constant 0 : i32
    %c0_i32_0 = arith.constant 0 : i32
    %c0_i32_1 = arith.constant 0 : i32
    return %c0_i32, %c0_i32_0 : i32, i32
  }
  func.func @transform_3(%arg0: i32) -> (i32, i32) {
    %c0_i32 = arith.constant 0 : i32
    %c0_i32_0 = arith.constant 0 : i32
    %c0_i32_1 = arith.constant 0 : i32
    return %c0_i32, %c0_i32_0 : i32, i32
  }
  func.func @transform_4(%arg0: i32) -> (i32, i32, i32) {
    %c0_i32 = arith.constant 0 : i32
    %c0_i32_0 = arith.constant 0 : i32
    %c0_i32_1 = arith.constant 0 : i32
    return %arg0, %c0_i32, %c0_i32_0 : i32, i32, i32
  }
}

</mosaic_0001>

<llo_original>
// kernel: _lambda_.1
$region0: #{_lambda_.1}
  #allocation0 [shape = 'u32[]', space=smem, size = 0x4, offset = 0x4, fixed_abs, tag = 'smem constant byte address 0x4 - core index']
  #allocation1 [shape = 'u32[144,128]{1,0:T(1,128)}', space=vmem, size = 0x12000, scoped, tag = 'internal scratch']
  %s0 = inlined_call_operand.vmem [shape: f32[1,2,256], index: 0, kind: input, shape index: {}]
  %s1 = inlined_call_operand.vmem [shape: f32[1,2,128], index: 1, kind: input, shape index: {}]
  %s2 = inlined_call_operand.hbm [shape: f32[256,256], index: 2, kind: input, shape index: {}]
  %s3 = inlined_call_operand.hbm [shape: f32[128,256], index: 3, kind: input, shape index: {}]
  %s4 = inlined_call_operand.vmem [shape: f32[1,2,256], index: 4, kind: output, shape index: {}]
  %s5 = sld [smem:[#allocation0]]
  $region34: #{_lambda_.1} parent=0
    _
  %s7 = ssub.s32 1, %s5
  %s8 = scalar_select 0, %s7, %s5
  $region1: #{_lambda_.1} parent=0
    #allocation2 [shape = 'u8[262144]{0}', space=vmem, size = 0x40000, scoped, tag = 'input window, operand 2, single buffered']
    #allocation3 [shape = 's32[1]{0}', space=sflag, size = 0x4, scoped, tag = 'scoped memory for _lambda_.1']
    #allocation4 [shape = 'u8[131072]{0}', space=vmem, size = 0x20000, scoped, tag = 'input window, operand 3, single buffered']
    #allocation5 [shape = 's32[1]{0}', space=sflag, size = 0x4, scoped, tag = 'scoped memory for _lambda_.1']
    %9 = vsyncpa [#allocation3], 0
    %10 = vsyncpa [#allocation5], 0
    // Predicated region
    $region2: #{_lambda_.1} parent=1 // pred_check
      _
    $region3: #{_lambda_.1} parent=1 // pred_check_branch
      %12 = sbr.rel (0) target = $region5
    $region4: #{_lambda_.1} parent=1 // pred_region
      _
    $region5: #{_lambda_.1} parent=1 // pred_fallthru
      _
    // Predicated region
    $region6: #{_lambda_.1} parent=1 // pred_check
      _
    $region7: #{_lambda_.1} parent=1 // pred_check_branch
      %14 = sbr.rel (0) target = $region9
    $region8: #{_lambda_.1} parent=1 // pred_region
      _
    $region9: #{_lambda_.1} parent=1 // pred_fallthru
      _
    // Predicated region
    $region10: #{_lambda_.1} parent=1 // pred_check
      _
    $region11: #{_lambda_.1} parent=1 // pred_check_branch
      %16 = sbr.rel (0) target = $region13
    $region12: #{_lambda_.1} parent=1 // pred_region
      %s18 = ssub.s32 8192, 8192
      %19 = vsyncadd [#allocation3], %s18
      %s20 = sshll.u32 [#allocation2], 4
      %s21 = int_to_ptr.vmem [resolvable:$true] %s20
      %26 = dma.hbm_to_vmem [thread:$0]  %s2, 8192, %s21, [#allocation3], 256, 256, 16
    $region13: #{_lambda_.1} parent=1 // pred_fallthru
      _
    // Predicated region
    $region14: #{_lambda_.1} parent=1 // pred_check
      _
    $region15: #{_lambda_.1} parent=1 // pred_check_branch
      %28 = sbr.rel (0) target = $region17
    $region16: #{_lambda_.1} parent=1 // pred_region
      %s30 = ssub.s32 4096, 4096
      %31 = vsyncadd [#allocation5], %s30
      %s32 = sshll.u32 [#allocation4], 4
      %s33 = int_to_ptr.vmem [resolvable:$true] %s32
      %38 = dma.hbm_to_vmem [thread:$0]  %s3, 4096, %s33, [#allocation5], 256, 256, 16
    $region17: #{_lambda_.1} parent=1 // pred_fallthru
      _
    // Predicated region
    $region18: #{_lambda_.1} parent=1 // pred_check
      _
    $region19: #{_lambda_.1} parent=1 // pred_check_branch
      %40 = sbr.rel (0) target = $region21
    $region20: #{_lambda_.1} parent=1 // pred_region
      %41 = dma.done [#allocation3], 8192
    $region21: #{_lambda_.1} parent=1 // pred_fallthru
      _
    // Predicated region
    $region22: #{_lambda_.1} parent=1 // pred_check
      _
    $region23: #{_lambda_.1} parent=1 // pred_check_branch
      %43 = sbr.rel (0) target = $region25
    $region24: #{_lambda_.1} parent=1 // pred_region
      %44 = dma.done [#allocation5], 4096
    $region25: #{_lambda_.1} parent=1 // pred_fallthru
      _
    %v45 = vld [vmem:[%s1] sm:$0x3]
    %v46 = vld [vmem:[#allocation4] sm:$0xff]
    %v47 = vld [vmem:[#allocation4 + $0x8] sm:$0xff]
    %v48 = vld [vmem:[#allocation4 + $0x10] sm:$0xff]
    %v49 = vld [vmem:[#allocation4 + $0x18] sm:$0xff]
    %v50 = vld [vmem:[#allocation4 + $0x20] sm:$0xff]
    %v51 = vld [vmem:[#allocation4 + $0x28] sm:$0xff]
    %v52 = vld [vmem:[#allocation4 + $0x30] sm:$0xff]
    %v53 = vld [vmem:[#allocation4 + $0x38] sm:$0xff]
    %v54 = vld [vmem:[#allocation4 + $0x40] sm:$0xff]
    %v55 = vld [vmem:[#allocation4 + $0x48] sm:$0xff]
    %v56 = vld [vmem:[#allocation4 + $0x50] sm:$0xff]
    %v57 = vld [vmem:[#allocation4 + $0x58] sm:$0xff]
    %v58 = vld [vmem:[#allocation4 + $0x60] sm:$0xff]
    %v59 = vld [vmem:[#allocation4 + $0x68] sm:$0xff]
    %v60 = vld [vmem:[#allocation4 + $0x70] sm:$0xff]
    %v61 = vld [vmem:[#allocation4 + $0x78] sm:$0xff]
    %v62 = vld [vmem:[#allocation4 + $0x80] sm:$0xff]
    %v63 = vld [vmem:[#allocation4 + $0x88] sm:$0xff]
    %v64 = vld [vmem:[#allocation4 + $0x90] sm:$0xff]
    %v65 = vld [vmem:[#allocation4 + $0x98] sm:$0xff]
    %v66 = vld [vmem:[#allocation4 + $0xa0] sm:$0xff]
    %v67 = vld [vmem:[#allocation4 + $0xa8] sm:$0xff]
    %v68 = vld [vmem:[#allocation4 + $0xb0] sm:$0xff]
    %v69 = vld [vmem:[#allocation4 + $0xb8] sm:$0xff]
    %v70 = vld [vmem:[#allocation4 + $0xc0] sm:$0xff]
    %v71 = vld [vmem:[#allocation4 + $0xc8] sm:$0xff]
    %v72 = vld [vmem:[#allocation4 + $0xd0] sm:$0xff]
    %v73 = vld [vmem:[#allocation4 + $0xd8] sm:$0xff]
    %v74 = vld [vmem:[#allocation4 + $0xe0] sm:$0xff]
    %v75 = vld [vmem:[#allocation4 + $0xe8] sm:$0xff]
    %v76 = vld [vmem:[#allocation4 + $0xf0] sm:$0xff]
    %v77 = vld [vmem:[#allocation4 + $0xf8] sm:$0xff]
    %v78 = vld [vmem:[%s0] sm:$0xf]
    %v79 = vmul.f32 %v78, 0.01
    %v82 = vunpack.c.l.s4 1983009808
    %v83 = vunpack.c.0.s8 %v82
    %v84 = vlaneseq
    %v85 = vshrl.u32 %v84, 7
    %v86 = vsub.s32 %v83, %v85
    %v87 = vrot.slane %v79, %v86
    %v88 = vcombine.high %v87, %v87
    %91 = vmatprep.subr.mxu0 %v47
    %92 = vmatpush1.msra.mxu0 %v46
    %93 = vmatprep.subr.mxu0 %v49
    %94 = vmatpush1.msra.mxu0 %v48
    %95 = vmatprep.subr.mxu0 %v51
    %96 = vmatpush1.msra.mxu0 %v50
    %97 = vmatprep.subr.mxu0 %v53
    %98 = vmatpush1.msra.mxu0 %v52
    %99 = vmatprep.subr.mxu0 %v55
    %100 = vmatpush1.msra.mxu0 %v54
    %101 = vmatprep.subr.mxu0 %v57
    %102 = vmatpush1.msra.mxu0 %v56
    %103 = vmatprep.subr.mxu0 %v59
    %104 = vmatpush1.msra.mxu0 %v58
    %105 = vmatprep.subr.mxu0 %v61
    %106 = vmatpush1.msra.mxu0 %v60
    %107 = vmatprep.subr.mxu0 %v63
    %108 = vmatpush1.msra.mxu0 %v62
    %109 = vmatprep.subr.mxu0 %v65
    %110 = vmatpush1.msra.mxu0 %v64
    %111 = vmatprep.subr.mxu0 %v67
    %112 = vmatpush1.msra.mxu0 %v66
    %113 = vmatprep.subr.mxu0 %v69
    %114 = vmatpush1.msra.mxu0 %v68
    %115 = vmatprep.subr.mxu0 %v71
    %116 = vmatpush1.msra.mxu0 %v70
    %117 = vmatprep.subr.mxu0 %v73
    %118 = vmatpush1.msra.mxu0 %v72
    %119 = vmatprep.subr.mxu0 %v75
    %120 = vmatpush1.msra.mxu0 %v74
    %121 = vmatprep.subr.mxu0 %v77
    %122 = vmatpush1.msra.mxu0 %v76
    %123 = vmatprep.subr.mxu0 0.0
    %124 = vmatpush1.msra.mxu0 0.0
    %125 = vmatprep.subr.mxu0 0.0
    %126 = vmatpush1.msra.mxu0 0.0
    %127 = vmatprep.subr.mxu0 0.0
    %128 = vmatpush1.msra.mxu0 0.0
    %129 = vmatprep.subr.mxu0 0.0
    %130 = vmatpush1.msra.mxu0 0.0
    %131 = vmatprep.subr.mxu0 0.0
    %132 = vmatpush1.msra.mxu0 0.0
    %133 = vmatprep.subr.mxu0 0.0
    %134 = vmatpush1.msra.mxu0 0.0
    %135 = vmatprep.subr.mxu0 0.0
    %136 = vmatpush1.msra.mxu0 0.0
    %137 = vmatprep.subr.mxu0 0.0
    %138 = vmatpush1.msra.mxu0 0.0
    %139 = vmatprep.subr.mxu0 0.0
    %140 = vmatpush1.msra.mxu0 0.0
    %141 = vmatprep.subr.mxu0 0.0
    %142 = vmatpush1.msra.mxu0 0.0
    %143 = vmatprep.subr.mxu0 0.0
    %144 = vmatpush1.msra.mxu0 0.0
    %145 = vmatprep.subr.mxu0 0.0
    %146 = vmatpush1.msra.mxu0 0.0
    %147 = vmatprep.subr.mxu0 0.0
    %148 = vmatpush1.msra.mxu0 0.0
    %149 = vmatprep.subr.mxu0 0.0
    %150 = vmatpush1.msra.mxu0 0.0
    %151 = vmatprep.subr.mxu0 0.0
    %152 = vmatpush1.msra.mxu0 0.0
    %153 = vmatprep.subr.mxu0 0.0
    %154 = vmatpush1.msra.mxu0 0.0
    %155 = vmatprep.mubr.f32.mxu0 0.0
    %156 = vmatmul.mubr.f32.gmra.mrb[0].mxu0 %v45
    %v157 = vpop.f32.mrb[0].mxu0
    %v158 = vadd.f32 %v87, %v157
    %v159 = vpop.f32.mrb[0].mxu0
    %v160 = vadd.f32 %v88, %v159
    %161 = vdwg.mxu0
    %v162 = vld [vmem:[#allocation2] sm:$0xff]
    %v163 = vld [vmem:[#allocation2 + $0x8] sm:$0xff]
    %v164 = vld [vmem:[#allocation2 + $0x10] sm:$0xff]
    %v165 = vld [vmem:[#allocation2 + $0x18] sm:$0xff]
    %v166 = vld [vmem:[#allocation2 + $0x20] sm:$0xff]
    %v167 = vld [vmem:[#allocation2 + $0x28] sm:$0xff]
    %v168 = vld [vmem:[#allocation2 + $0x30] sm:$0xff]
    %v169 = vld [vmem:[#allocation2 + $0x38] sm:$0xff]
    %v170 = vld [vmem:[#allocation2 + $0x40] sm:$0xff]
    %v171 = vld [vmem:[#allocation2 + $0x48] sm:$0xff]
    %v172 = vld [vmem:[#allocation2 + $0x50] sm:$0xff]
    %v173 = vld [vmem:[#allocation2 + $0x58] sm:$0xff]
    %v174 = vld [vmem:[#allocation2 + $0x60] sm:$0xff]
    %v175 = vld [vmem:[#allocation2 + $0x68] sm:$0xff]
    %v176 = vld [vmem:[#allocation2 + $0x70] sm:$0xff]
    %v177 = vld [vmem:[#allocation2 + $0x78] sm:$0xff]
    %v178 = vld [vmem:[#allocation2 + $0x80] sm:$0xff]
    %v179 = vld [vmem:[#allocation2 + $0x88] sm:$0xff]
    %v180 = vld [vmem:[#allocation2 + $0x90] sm:$0xff]
    %v181 = vld [vmem:[#allocation2 + $0x98] sm:$0xff]
    %v182 = vld [vmem:[#allocation2 + $0xa0] sm:$0xff]
    %v183 = vld [vmem:[#allocation2 + $0xa8] sm:$0xff]
    %v184 = vld [vmem:[#allocation2 + $0xb0] sm:$0xff]
    %v185 = vld [vmem:[#allocation2 + $0xb8] sm:$0xff]
    %v186 = vld [vmem:[#allocation2 + $0xc0] sm:$0xff]
    %v187 = vld [vmem:[#allocation2 + $0xc8] sm:$0xff]
    %v188 = vld [vmem:[#allocation2 + $0xd0] sm:$0xff]
    %v189 = vld [vmem:[#allocation2 + $0xd8] sm:$0xff]
    %v190 = vld [vmem:[#allocation2 + $0xe0] sm:$0xff]
    %v191 = vld [vmem:[#allocation2 + $0xe8] sm:$0xff]
    %v192 = vld [vmem:[#allocation2 + $0xf0] sm:$0xff]
    %v193 = vld [vmem:[#allocation2 + $0xf8] sm:$0xff]
    %v194 = vld [vmem:[#allocation2 + $0x100] sm:$0xff]
    %v195 = vld [vmem:[#allocation2 + $0x108] sm:$0xff]
    %v196 = vld [vmem:[#allocation2 + $0x110] sm:$0xff]
    %v197 = vld [vmem:[#allocation2 + $0x118] sm:$0xff]
    %v198 = vld [vmem:[#allocation2 + $0x120] sm:$0xff]
    %v199 = vld [vmem:[#allocation2 + $0x128] sm:$0xff]
    %v200 = vld [vmem:[#allocation2 + $0x130] sm:$0xff]
    %v201 = vld [vmem:[#allocation2 + $0x138] sm:$0xff]
    %v202 = vld [vmem:[#allocation2 + $0x140] sm:$0xff]
    %v203 = vld [vmem:[#allocation2 + $0x148] sm:$0xff]
    %v204 = vld [vmem:[#allocation2 + $0x150] sm:$0xff]
    %v205 = vld [vmem:[#allocation2 + $0x158] sm:$0xff]
    %v206 = vld [vmem:[#allocation2 + $0x160] sm:$0xff]
    %v207 = vld [vmem:[#allocation2 + $0x168] sm:$0xff]
    %v208 = vld [vmem:[#allocation2 + $0x170] sm:$0xff]
    %v209 = vld [vmem:[#allocation2 + $0x178] sm:$0xff]
    %v210 = vld [vmem:[#allocation2 + $0x180] sm:$0xff]
    %v211 = vld [vmem:[#allocation2 + $0x188] sm:$0xff]
    %v212 = vld [vmem:[#allocation2 + $0x190] sm:$0xff]
    %v213 = vld [vmem:[#allocation2 + $0x198] sm:$0xff]
    %v214 = vld [vmem:[#allocation2 + $0x1a0] sm:$0xff]
    %v215 = vld [vmem:[#allocation2 + $0x1a8] sm:$0xff]
    %v216 = vld [vmem:[#allocation2 + $0x1b0] sm:$0xff]
    %v217 = vld [vmem:[#allocation2 + $0x1b8] sm:$0xff]
    %v218 = vld [vmem:[#allocation2 + $0x1c0] sm:$0xff]
    %v219 = vld [vmem:[#allocation2 + $0x1c8] sm:$0xff]
    %v220 = vld [vmem:[#allocation2 + $0x1d0] sm:$0xff]
    %v221 = vld [vmem:[#allocation2 + $0x1d8] sm:$0xff]
    %v222 = vld [vmem:[#allocation2 + $0x1e0] sm:$0xff]
    %v223 = vld [vmem:[#allocation2 + $0x1e8] sm:$0xff]
    %v224 = vld [vmem:[#allocation2 + $0x1f0] sm:$0xff]
    %v225 = vld [vmem:[#allocation2 + $0x1f8] sm:$0xff]
    %v226 = vmul.f32 %v158, %v158
    %v227 = vmul.f32 %v160, %v160
    %v228 = vmul.f32 %v226, %v226
    %v229 = vmul.f32 %v227, %v227
    %vm230 = vcmask 1041408
    %v231 = vsel %vm230, %v228, 0.0
    %v232 = vsel %vm230, %v229, 0.0
    %v233 = vadd.f32 %v231, %v232
    %234 = vadd.xlane.f32.xlu0 %v233
    %v235 = vpop.xlane.xlu0 %234
    %v236 = vrsqrt.pop %v235
    %v237 = vmul.f32 %v235, %v236
    %vm238 = vcmp.eq.f32.partialorder %v235, inf
    %v239 = vsel %vm238, %v235, %v237
    %vm240 = vcmp.eq.f32.partialorder %v235, 0.0
    %v241 = vand.u32 %v235, 2147483648
    %v242 = vsel %vm240, %v241, %v239
    %243 = vmatprep.subr.mxu0 %v163
    %244 = vmatpush1.msra.mxu0 %v162
    %245 = vmatprep.subr.mxu0 %v165
    %246 = vmatpush1.msra.mxu0 %v164
    %247 = vmatprep.subr.mxu0 %v167
    %248 = vmatpush1.msra.mxu0 %v166
    %249 = vmatprep.subr.mxu0 %v169
    %250 = vmatpush1.msra.mxu0 %v168
    %251 = vmatprep.subr.mxu0 %v171
    %252 = vmatpush1.msra.mxu0 %v170
    %253 = vmatprep.subr.mxu0 %v173
    %254 = vmatpush1.msra.mxu0 %v172
    %255 = vmatprep.subr.mxu0 %v175
    %256 = vmatpush1.msra.mxu0 %v174
    %257 = vmatprep.subr.mxu0 %v177
    %258 = vmatpush1.msra.mxu0 %v176
    %259 = vmatprep.subr.mxu0 %v179
    %260 = vmatpush1.msra.mxu0 %v178
    %261 = vmatprep.subr.mxu0 %v181
    %262 = vmatpush1.msra.mxu0 %v180
    %263 = vmatprep.subr.mxu0 %v183
    %264 = vmatpush1.msra.mxu0 %v182
    %265 = vmatprep.subr.mxu0 %v185
    %266 = vmatpush1.msra.mxu0 %v184
    %267 = vmatprep.subr.mxu0 %v187
    %268 = vmatpush1.msra.mxu0 %v186
    %269 = vmatprep.subr.mxu0 %v189
    %270 = vmatpush1.msra.mxu0 %v188
    %271 = vmatprep.subr.mxu0 %v191
    %272 = vmatpush1.msra.mxu0 %v190
    %273 = vmatprep.subr.mxu0 %v193
    %274 = vmatpush1.msra.mxu0 %v192
    %275 = vmatprep.subr.mxu0 %v195
    %276 = vmatpush1.msra.mxu0 %v194
    %277 = vmatprep.subr.mxu0 %v197
    %278 = vmatpush1.msra.mxu0 %v196
    %279 = vmatprep.subr.mxu0 %v199
    %280 = vmatpush1.msra.mxu0 %v198
    %281 = vmatprep.subr.mxu0 %v201
    %282 = vmatpush1.msra.mxu0 %v200
    %283 = vmatprep.subr.mxu0 %v203
    %284 = vmatpush1.msra.mxu0 %v202
    %285 = vmatprep.subr.mxu0 %v205
    %286 = vmatpush1.msra.mxu0 %v204
    %287 = vmatprep.subr.mxu0 %v207
    %288 = vmatpush1.msra.mxu0 %v206
    %289 = vmatprep.subr.mxu0 %v209
    %290 = vmatpush1.msra.mxu0 %v208
    %291 = vmatprep.subr.mxu0 %v211
    %292 = vmatpush1.msra.mxu0 %v210
    %293 = vmatprep.subr.mxu0 %v213
    %294 = vmatpush1.msra.mxu0 %v212
    %295 = vmatprep.subr.mxu0 %v215
    %296 = vmatpush1.msra.mxu0 %v214
    %297 = vmatprep.subr.mxu0 %v217
    %298 = vmatpush1.msra.mxu0 %v216
    %299 = vmatprep.subr.mxu0 %v219
    %300 = vmatpush1.msra.mxu0 %v218
    %301 = vmatprep.subr.mxu0 %v221
    %302 = vmatpush1.msra.mxu0 %v220
    %303 = vmatprep.subr.mxu0 %v223
    %304 = vmatpush1.msra.mxu0 %v222
    %305 = vmatprep.subr.mxu0 %v225
    %306 = vmatpush1.msra.mxu0 %v224
    %307 = vmatprep.mubr.f32.mxu0 %v160
    %308 = vmatmul.mubr.f32.gmra.mrb[0].mxu0 %v158
    %v309 = vpop.f32.mrb[0].mxu0
    %v310 = vadd.f32 0.0, %v309
    %v311 = vpop.f32.mrb[0].mxu0
    %v312 = vadd.f32 0.0, %v311
    %313 = vdwg.mxu0
    %v314 = vmul.f32 %v158, %v310
    %v315 = vmul.f32 %v160, %v312
    %v316 = vmul.f32 %v314, %v314
    %v317 = vmul.f32 %v315, %v315
    %v318 = vsel %vm230, %v316, 0.0
    %v319 = vsel %vm230, %v317, 0.0
    %v320 = vadd.f32 %v318, %v319
    %321 = vadd.xlane.f32.xlu0 %v320
    %v322 = vpop.xlane.xlu0 %321
    %v323 = vrsqrt.pop %v322
    %v324 = vmul.f32 %v322, %v323
    %vm325 = vcmp.eq.f32.partialorder %v322, inf
    %v326 = vsel %vm325, %v322, %v324
    %vm327 = vcmp.eq.f32.partialorder %v322, 0.0
    %v328 = vand.u32 %v322, 2147483648
    %v329 = vsel %vm327, %v328, %v326
    %v330 = vrcp.pop %v329
    %v331 = vmul.f32 %v242, %v330
    %v332 = vmul.f32 %v331, %v158
    %v333 = vmul.f32 %v331, %v160
    %v334 = vadd.f32 %v332, 0.0
    %v335 = vadd.f32 %v333, 0.0
    %v336 = vmul.f32 %v331, %v310
    %v337 = vmul.f32 %v331, %v312
    %v338 = vsub.f32 %v158, %v336
    %v339 = vsub.f32 %v160, %v337
    %v340 = vmul.f32 %v338, %v338
    %v341 = vmul.f32 %v339, %v339
    %v342 = vmul.f32 %v340, %v340
    %v343 = vmul.f32 %v341, %v341
    %v344 = vsel %vm230, %v342, 0.0
    %v345 = vsel %vm230, %v343, 0.0
    %v346 = vadd.f32 %v344, %v345
    %347 = vadd.xlane.f32.xlu0 %v346
    %v348 = vpop.xlane.xlu0 %347
    %v349 = vrsqrt.pop %v348
    %v350 = vmul.f32 %v348, %v349
    %vm351 = vcmp.eq.f32.partialorder %v348, inf
    %v352 = vsel %vm351, %v348, %v350
    %vm353 = vcmp.eq.f32.partialorder %v348, 0.0
    %v354 = vand.u32 %v348, 2147483648
    %v355 = vsel %vm353, %v354, %v352
    %vm356 = vcmp.lt.f32.partialorder %v355, 1e-10
    %v357 = vrcp.pop %v242
    %v358 = vmul.f32 %v355, %v357
    %v359 = vmul.f32 %v358, %v158
    %v360 = vmul.f32 %v358, %v160
    %v361 = vadd.f32 %v338, %v359
    %v362 = vadd.f32 %v339, %v360
    %v363 = vsel %vm356, 1, 0
    %vm364 = vcmp.eq.s32.totalorder %v363, 1
    %v365 = vsel %vm364, %v158, %v361
    %v366 = vsel %vm364, %v160, %v362
    %v367 = vsel %vm356, %v242, %v355
    %368 = vmatprep.subr.mxu0 %v163
    %369 = vmatpush1.msra.mxu0 %v162
    %370 = vmatprep.subr.mxu0 %v165
    %371 = vmatpush1.msra.mxu0 %v164
    %372 = vmatprep.subr.mxu0 %v167
    %373 = vmatpush1.msra.mxu0 %v166
    %374 = vmatprep.subr.mxu0 %v169
    %375 = vmatpush1.msra.mxu0 %v168
    %376 = vmatprep.subr.mxu0 %v171
    %377 = vmatpush1.msra.mxu0 %v170
    %378 = vmatprep.subr.mxu0 %v173
    %379 = vmatpush1.msra.mxu0 %v172
    %380 = vmatprep.subr.mxu0 %v175
    %381 = vmatpush1.msra.mxu0 %v174
    %382 = vmatprep.subr.mxu0 %v177
    %383 = vmatpush1.msra.mxu0 %v176
    %384 = vmatprep.subr.mxu0 %v179
    %385 = vmatpush1.msra.mxu0 %v178
    %386 = vmatprep.subr.mxu0 %v181
    %387 = vmatpush1.msra.mxu0 %v180
    %388 = vmatprep.subr.mxu0 %v183
    %389 = vmatpush1.msra.mxu0 %v182
    %390 = vmatprep.subr.mxu0 %v185
    %391 = vmatpush1.msra.mxu0 %v184
    %392 = vmatprep.subr.mxu0 %v187
    %393 = vmatpush1.msra.mxu0 %v186
    %394 = vmatprep.subr.mxu0 %v189
    %395 = vmatpush1.msra.mxu0 %v188
    %396 = vmatprep.subr.mxu0 %v191
    %397 = vmatpush1.msra.mxu0 %v190
    %398 = vmatprep.subr.mxu0 %v193
    %399 = vmatpush1.msra.mxu0 %v192
    %400 = vmatprep.subr.mxu0 %v195
    %401 = vmatpush1.msra.mxu0 %v194
    %402 = vmatprep.subr.mxu0 %v197
    %403 = vmatpush1.msra.mxu0 %v196
    %404 = vmatprep.subr.mxu0 %v199
    %405 = vmatpush1.msra.mxu0 %v198
    %406 = vmatprep.subr.mxu0 %v201
    %407 = vmatpush1.msra.mxu0 %v200
    %408 = vmatprep.subr.mxu0 %v203
    %409 = vmatpush1.msra.mxu0 %v202
    %410 = vmatprep.subr.mxu0 %v205
    %411 = vmatpush1.msra.mxu0 %v204
    %412 = vmatprep.subr.mxu0 %v207
    %413 = vmatpush1.msra.mxu0 %v206
    %414 = vmatprep.subr.mxu0 %v209
    %415 = vmatpush1.msra.mxu0 %v208
    %416 = vmatprep.subr.mxu0 %v211
    %417 = vmatpush1.msra.mxu0 %v210
    %418 = vmatprep.subr.mxu0 %v213
    %419 = vmatpush1.msra.mxu0 %v212
    %420 = vmatprep.subr.mxu0 %v215
    %421 = vmatpush1.msra.mxu0 %v214
    %422 = vmatprep.subr.mxu0 %v217
    %423 = vmatpush1.msra.mxu0 %v216
    %424 = vmatprep.subr.mxu0 %v219
    %425 = vmatpush1.msra.mxu0 %v218
    %426 = vmatprep.subr.mxu0 %v221
    %427 = vmatpush1.msra.mxu0 %v220
    %428 = vmatprep.subr.mxu0 %v223
    %429 = vmatpush1.msra.mxu0 %v222
    %430 = vmatprep.subr.mxu0 %v225
    %431 = vmatpush1.msra.mxu0 %v224
    %432 = vmatprep.mubr.f32.mxu0 %v366
    %433 = vmatmul.mubr.f32.gmra.mrb[0].mxu0 %v365
    %v434 = vpop.f32.mrb[0].mxu0
    %v435 = vadd.f32 0.0, %v434
    %v436 = vpop.f32.mrb[0].mxu0
    %v437 = vadd.f32 0.0, %v436
    %438 = vdwg.mxu0
    %v439 = vmul.f32 %v365, %v435
    %v440 = vmul.f32 %v366, %v437
    %v441 = vmul.f32 %v439, %v439
    %v442 = vmul.f32 %v440, %v440
    %v443 = vsel %vm230, %v441, 0.0
    %v444 = vsel %vm230, %v442, 0.0
    %v445 = vadd.f32 %v443, %v444
    %446 = vadd.xlane.f32.xlu0 %v445
    %v447 = vpop.xlane.xlu0 %446
    %v448 = vrsqrt.pop %v447
    %v449 = vmul.f32 %v447, %v448
    %vm450 = vcmp.eq.f32.partialorder %v447, inf
    %v451 = vsel %vm450, %v447, %v449
    %vm452 = vcmp.eq.f32.partialorder %v447, 0.0
    %v453 = vand.u32 %v447, 2147483648
    %v454 = vsel %vm452, %v453, %v451
    %v455 = vrcp.pop %v454
    %v456 = vmul.f32 %v367, %v455
    %v457 = vmul.f32 %v456, %v365
    %v458 = vmul.f32 %v456, %v366
    %v459 = vadd.f32 %v334, %v457
    %v460 = vadd.f32 %v335, %v458
    %v461 = vmul.f32 %v456, %v435
    %v462 = vmul.f32 %v456, %v437
    %v463 = vsub.f32 %v338, %v461
    %v464 = vsub.f32 %v339, %v462
    %v465 = vmul.f32 %v463, %v463
    %v466 = vmul.f32 %v464, %v464
    %v467 = vmul.f32 %v465, %v465
    %v468 = vmul.f32 %v466, %v466
    %v469 = vsel %vm230, %v467, 0.0
    %v470 = vsel %vm230, %v468, 0.0
    %v471 = vadd.f32 %v469, %v470
    %472 = vadd.xlane.f32.xlu0 %v471
    %v473 = vpop.xlane.xlu0 %472
    %v474 = vrsqrt.pop %v473
    %v475 = vmul.f32 %v473, %v474
    %vm476 = vcmp.eq.f32.partialorder %v473, inf
    %v477 = vsel %vm476, %v473, %v475
    %vm478 = vcmp.eq.f32.partialorder %v473, 0.0
    %v479 = vand.u32 %v473, 2147483648
    %v480 = vsel %vm478, %v479, %v477
    %vm481 = vcmp.lt.f32.partialorder %v480, 1e-10
    %v482 = vrcp.pop %v367
    %v483 = vmul.f32 %v480, %v482
    %v484 = vmul.f32 %v483, %v365
    %v485 = vmul.f32 %v483, %v366
    %v486 = vadd.f32 %v463, %v484
    %v487 = vadd.f32 %v464, %v485
    %v488 = vsel %vm364, %v334, %v459
    %v489 = vsel %vm364, %v335, %v460
    %v490 = vsel %vm364, %v338, %v463
    %v491 = vsel %vm364, %v339, %v464
    %vm492 = vmor %vm356, %vm481
    %v493 = vsel %vm492, 1, 0
    %vm494 = vcmp.eq.s32.totalorder %v493, 1
    %v495 = vsel %vm494, %v365, %v486
    %v496 = vsel %vm494, %v366, %v487
    %v497 = vsel %vm492, %v367, %v480
    %498 = vmatprep.subr.mxu0 %v163
    %499 = vmatpush1.msra.mxu0 %v162
    %500 = vmatprep.subr.mxu0 %v165
    %501 = vmatpush1.msra.mxu0 %v164
    %502 = vmatprep.subr.mxu0 %v167
    %503 = vmatpush1.msra.mxu0 %v166
    %504 = vmatprep.subr.mxu0 %v169
    %505 = vmatpush1.msra.mxu0 %v168
    %506 = vmatprep.subr.mxu0 %v171
    %507 = vmatpush1.msra.mxu0 %v170
    %508 = vmatprep.subr.mxu0 %v173
    %509 = vmatpush1.msra.mxu0 %v172
    %510 = vmatprep.subr.mxu0 %v175
    %511 = vmatpush1.msra.mxu0 %v174
    %512 = vmatprep.subr.mxu0 %v177
    %513 = vmatpush1.msra.mxu0 %v176
    %514 = vmatprep.subr.mxu0 %v179
    %515 = vmatpush1.msra.mxu0 %v178
    %516 = vmatprep.subr.mxu0 %v181
    %517 = vmatpush1.msra.mxu0 %v180
    %518 = vmatprep.subr.mxu0 %v183
    %519 = vmatpush1.msra.mxu0 %v182
    %520 = vmatprep.subr.mxu0 %v185
    %521 = vmatpush1.msra.mxu0 %v184
    %522 = vmatprep.subr.mxu0 %v187
    %523 = vmatpush1.msra.mxu0 %v186
    %524 = vmatprep.subr.mxu0 %v189
    %525 = vmatpush1.msra.mxu0 %v188
    %526 = vmatprep.subr.mxu0 %v191
    %527 = vmatpush1.msra.mxu0 %v190
    %528 = vmatprep.subr.mxu0 %v193
    %529 = vmatpush1.msra.mxu0 %v192
    %530 = vmatprep.subr.mxu0 %v195
    %531 = vmatpush1.msra.mxu0 %v194
    %532 = vmatprep.subr.mxu0 %v197
    %533 = vmatpush1.msra.mxu0 %v196
    %534 = vmatprep.subr.mxu0 %v199
    %535 = vmatpush1.msra.mxu0 %v198
    %536 = vmatprep.subr.mxu0 %v201
    %537 = vmatpush1.msra.mxu0 %v200
    %538 = vmatprep.subr.mxu0 %v203
    %539 = vmatpush1.msra.mxu0 %v202
    %540 = vmatprep.subr.mxu0 %v205
    %541 = vmatpush1.msra.mxu0 %v204
    %542 = vmatprep.subr.mxu0 %v207
    %543 = vmatpush1.msra.mxu0 %v206
    %544 = vmatprep.subr.mxu0 %v209
    %545 = vmatpush1.msra.mxu0 %v208
    %546 = vmatprep.subr.mxu0 %v211
    %547 = vmatpush1.msra.mxu0 %v210
    %548 = vmatprep.subr.mxu0 %v213
    %549 = vmatpush1.msra.mxu0 %v212
    %550 = vmatprep.subr.mxu0 %v215
    %551 = vmatpush1.msra.mxu0 %v214
    %552 = vmatprep.subr.mxu0 %v217
    %553 = vmatpush1.msra.mxu0 %v216
    %554 = vmatprep.subr.mxu0 %v219
    %555 = vmatpush1.msra.mxu0 %v218
    %556 = vmatprep.subr.mxu0 %v221
    %557 = vmatpush1.msra.mxu0 %v220
    %558 = vmatprep.subr.mxu0 %v223
    %559 = vmatpush1.msra.mxu0 %v222
    %560 = vmatprep.subr.mxu0 %v225
    %561 = vmatpush1.msra.mxu0 %v224
    %562 = vmatprep.mubr.f32.mxu0 %v496
    %563 = vmatmul.mubr.f32.gmra.mrb[0].mxu0 %v495
    %v564 = vpop.f32.mrb[0].mxu0
    %v565 = vadd.f32 0.0, %v564
    %v566 = vpop.f32.mrb[0].mxu0
    %v567 = vadd.f32 0.0, %v566
    %568 = vdwg.mxu0
    %v569 = vmul.f32 %v495, %v565
    %v570 = vmul.f32 %v496, %v567
    %v571 = vmul.f32 %v569, %v569
    %v572 = vmul.f32 %v570, %v570
    %v573 = vsel %vm230, %v571, 0.0
    %v574 = vsel %vm230, %v572, 0.0
    %v575 = vadd.f32 %v573, %v574
    %576 = vadd.xlane.f32.xlu0 %v575
    %v577 = vpop.xlane.xlu0 %576
    %v578 = vrsqrt.pop %v577
    %v579 = vmul.f32 %v577, %v578
    %vm580 = vcmp.eq.f32.partialorder %v577, inf
    %v581 = vsel %vm580, %v577, %v579
    %vm582 = vcmp.eq.f32.partialorder %v577, 0.0
    %v583 = vand.u32 %v577, 2147483648
    %v584 = vsel %vm582, %v583, %v581
    %v585 = vrcp.pop %v584
    %v586 = vmul.f32 %v497, %v585
    %v587 = vmul.f32 %v586, %v495
    %v588 = vmul.f32 %v586, %v496
    %v589 = vadd.f32 %v488, %v587
    %v590 = vadd.f32 %v489, %v588
    %v591 = vmul.f32 %v586, %v565
    %v592 = vmul.f32 %v586, %v567
    %v593 = vsub.f32 %v490, %v591
    %v594 = vsub.f32 %v491, %v592
    %v595 = vmul.f32 %v593, %v593
    %v596 = vmul.f32 %v594, %v594
    %v597 = vmul.f32 %v595, %v595
    %v598 = vmul.f32 %v596, %v596
    %v599 = vsel %vm230, %v597, 0.0
    %v600 = vsel %vm230, %v598, 0.0
    %v601 = vadd.f32 %v599, %v600
    %602 = vadd.xlane.f32.xlu0 %v601
    %v603 = vpop.xlane.xlu0 %602
    %v604 = vrsqrt.pop %v603
    %v605 = vmul.f32 %v603, %v604
    %vm606 = vcmp.eq.f32.partialorder %v603, inf
    %v607 = vsel %vm606, %v603, %v605
    %vm608 = vcmp.eq.f32.partialorder %v603, 0.0
    %v609 = vand.u32 %v603, 2147483648
    %v610 = vsel %vm608, %v609, %v607
    %vm611 = vcmp.lt.f32.partialorder %v610, 1e-10
    %v612 = vrcp.pop %v497
    %v613 = vmul.f32 %v610, %v612
    %v614 = vmul.f32 %v613, %v495
    %v615 = vmul.f32 %v613, %v496
    %v616 = vadd.f32 %v593, %v614
    %v617 = vadd.f32 %v594, %v615
    %v618 = vsel %vm494, %v488, %v589
    %v619 = vsel %vm494, %v489, %v590
    %v620 = vsel %vm494, %v490, %v593
    %v621 = vsel %vm494, %v491, %v594
    %vm622 = vmor %vm492, %vm611
    %v623 = vsel %vm622, 1, 0
    %vm624 = vcmp.eq.s32.totalorder %v623, 1
    %v625 = vsel %vm624, %v495, %v616
    %v626 = vsel %vm624, %v496, %v617
    %v627 = vsel %vm622, %v497, %v610
    %628 = vmatprep.subr.mxu0 %v163
    %629 = vmatpush1.msra.mxu0 %v162
    %630 = vmatprep.subr.mxu0 %v165
    %631 = vmatpush1.msra.mxu0 %v164
    %632 = vmatprep.subr.mxu0 %v167
    %633 = vmatpush1.msra.mxu0 %v166
    %634 = vmatprep.subr.mxu0 %v169
    %635 = vmatpush1.msra.mxu0 %v168
    %636 = vmatprep.subr.mxu0 %v171
    %637 = vmatpush1.msra.mxu0 %v170
    %638 = vmatprep.subr.mxu0 %v173
    %639 = vmatpush1.msra.mxu0 %v172
    %640 = vmatprep.subr.mxu0 %v175
    %641 = vmatpush1.msra.mxu0 %v174
    %642 = vmatprep.subr.mxu0 %v177
    %643 = vmatpush1.msra.mxu0 %v176
    %644 = vmatprep.subr.mxu0 %v179
    %645 = vmatpush1.msra.mxu0 %v178
    %646 = vmatprep.subr.mxu0 %v181
    %647 = vmatpush1.msra.mxu0 %v180
    %648 = vmatprep.subr.mxu0 %v183
    %649 = vmatpush1.msra.mxu0 %v182
    %650 = vmatprep.subr.mxu0 %v185
    %651 = vmatpush1.msra.mxu0 %v184
    %652 = vmatprep.subr.mxu0 %v187
    %653 = vmatpush1.msra.mxu0 %v186
    %654 = vmatprep.subr.mxu0 %v189
    %655 = vmatpush1.msra.mxu0 %v188
    %656 = vmatprep.subr.mxu0 %v191
    %657 = vmatpush1.msra.mxu0 %v190
    %658 = vmatprep.subr.mxu0 %v193
    %659 = vmatpush1.msra.mxu0 %v192
    %660 = vmatprep.subr.mxu0 %v195
    %661 = vmatpush1.msra.mxu0 %v194
    %662 = vmatprep.subr.mxu0 %v197
    %663 = vmatpush1.msra.mxu0 %v196
    %664 = vmatprep.subr.mxu0 %v199
    %665 = vmatpush1.msra.mxu0 %v198
    %666 = vmatprep.subr.mxu0 %v201
    %667 = vmatpush1.msra.mxu0 %v200
    %668 = vmatprep.subr.mxu0 %v203
    %669 = vmatpush1.msra.mxu0 %v202
    %670 = vmatprep.subr.mxu0 %v205
    %671 = vmatpush1.msra.mxu0 %v204
    %672 = vmatprep.subr.mxu0 %v207
    %673 = vmatpush1.msra.mxu0 %v206
    %674 = vmatprep.subr.mxu0 %v209
    %675 = vmatpush1.msra.mxu0 %v208
    %676 = vmatprep.subr.mxu0 %v211
    %677 = vmatpush1.msra.mxu0 %v210
    %678 = vmatprep.subr.mxu0 %v213
    %679 = vmatpush1.msra.mxu0 %v212
    %680 = vmatprep.subr.mxu0 %v215
    %681 = vmatpush1.msra.mxu0 %v214
    %682 = vmatprep.subr.mxu0 %v217
    %683 = vmatpush1.msra.mxu0 %v216
    %684 = vmatprep.subr.mxu0 %v219
    %685 = vmatpush1.msra.mxu0 %v218
    %686 = vmatprep.subr.mxu0 %v221
    %687 = vmatpush1.msra.mxu0 %v220
    %688 = vmatprep.subr.mxu0 %v223
    %689 = vmatpush1.msra.mxu0 %v222
    %690 = vmatprep.subr.mxu0 %v225
    %691 = vmatpush1.msra.mxu0 %v224
    %692 = vmatprep.mubr.f32.mxu0 %v626
    %693 = vmatmul.mubr.f32.gmra.mrb[0].mxu0 %v625
    %v694 = vpop.f32.mrb[0].mxu0
    %v695 = vadd.f32 0.0, %v694
    %v696 = vpop.f32.mrb[0].mxu0
    %v697 = vadd.f32 0.0, %v696
    %698 = vdwg.mxu0
    %v699 = vmul.f32 %v625, %v695
    %v700 = vmul.f32 %v626, %v697
    %v701 = vmul.f32 %v699, %v699
    %v702 = vmul.f32 %v700, %v700
    %v703 = vsel %vm230, %v701, 0.0
    %v704 = vsel %vm230, %v702, 0.0
    %v705 = vadd.f32 %v703, %v704
    %706 = vadd.xlane.f32.xlu0 %v705
    %v707 = vpop.xlane.xlu0 %706
    %v708 = vrsqrt.pop %v707
    %v709 = vmul.f32 %v707, %v708
    %vm710 = vcmp.eq.f32.partialorder %v707, inf
    %v711 = vsel %vm710, %v707, %v709
    %vm712 = vcmp.eq.f32.partialorder %v707, 0.0
    %v713 = vand.u32 %v707, 2147483648
    %v714 = vsel %vm712, %v713, %v711
    %v715 = vrcp.pop %v714
    %v716 = vmul.f32 %v627, %v715
    %v717 = vmul.f32 %v716, %v625
    %v718 = vmul.f32 %v716, %v626
    %v719 = vadd.f32 %v618, %v717
    %v720 = vadd.f32 %v619, %v718
    %v721 = vmul.f32 %v716, %v695
    %v722 = vmul.f32 %v716, %v697
    %v723 = vsub.f32 %v620, %v721
    %v724 = vsub.f32 %v621, %v722
    %v725 = vmul.f32 %v723, %v723
    %v726 = vmul.f32 %v724, %v724
    %v727 = vmul.f32 %v725, %v725
    %v728 = vmul.f32 %v726, %v726
    %v729 = vsel %vm230, %v727, 0.0
    %v730 = vsel %vm230, %v728, 0.0
    %v731 = vadd.f32 %v729, %v730
    %732 = vadd.xlane.f32.xlu0 %v731
    %v733 = vpop.xlane.xlu0 %732
    %v734 = vrsqrt.pop %v733
    %v735 = vmul.f32 %v733, %v734
    %vm736 = vcmp.eq.f32.partialorder %v733, inf
    %v737 = vsel %vm736, %v733, %v735
    %vm738 = vcmp.eq.f32.partialorder %v733, 0.0
    %v739 = vand.u32 %v733, 2147483648
    %v740 = vsel %vm738, %v739, %v737
    %vm741 = vcmp.lt.f32.partialorder %v740, 1e-10
    %v742 = vrcp.pop %v627
    %v743 = vmul.f32 %v740, %v742
    %v744 = vmul.f32 %v743, %v625
    %v745 = vmul.f32 %v743, %v626
    %v746 = vadd.f32 %v723, %v744
    %v747 = vadd.f32 %v724, %v745
    %v748 = vsel %vm624, %v618, %v719
    %v749 = vsel %vm624, %v619, %v720
    %vm750 = vmor %vm622, %vm741
    %v751 = vsel %vm750, 1, 0
    %vm752 = vcmp.eq.s32.totalorder %v751, 1
    %v753 = vsel %vm752, %v625, %v746
    %v754 = vsel %vm752, %v626, %v747
    %v755 = vsel %vm750, %v627, %v740
    %756 = vmatprep.subr.mxu0 %v163
    %757 = vmatpush1.msra.mxu0 %v162
    %758 = vmatprep.subr.mxu0 %v165
    %759 = vmatpush1.msra.mxu0 %v164
    %760 = vmatprep.subr.mxu0 %v167
    %761 = vmatpush1.msra.mxu0 %v166
    %762 = vmatprep.subr.mxu0 %v169
    %763 = vmatpush1.msra.mxu0 %v168
    %764 = vmatprep.subr.mxu0 %v171
    %765 = vmatpush1.msra.mxu0 %v170
    %766 = vmatprep.subr.mxu0 %v173
    %767 = vmatpush1.msra.mxu0 %v172
    %768 = vmatprep.subr.mxu0 %v175
    %769 = vmatpush1.msra.mxu0 %v174
    %770 = vmatprep.subr.mxu0 %v177
    %771 = vmatpush1.msra.mxu0 %v176
    %772 = vmatprep.subr.mxu0 %v179
    %773 = vmatpush1.msra.mxu0 %v178
    %774 = vmatprep.subr.mxu0 %v181
    %775 = vmatpush1.msra.mxu0 %v180
    %776 = vmatprep.subr.mxu0 %v183
    %777 = vmatpush1.msra.mxu0 %v182
    %778 = vmatprep.subr.mxu0 %v185
    %779 = vmatpush1.msra.mxu0 %v184
    %780 = vmatprep.subr.mxu0 %v187
    %781 = vmatpush1.msra.mxu0 %v186
    %782 = vmatprep.subr.mxu0 %v189
    %783 = vmatpush1.msra.mxu0 %v188
    %784 = vmatprep.subr.mxu0 %v191
    %785 = vmatpush1.msra.mxu0 %v190
    %786 = vmatprep.subr.mxu0 %v193
    %787 = vmatpush1.msra.mxu0 %v192
    %788 = vmatprep.subr.mxu0 %v195
    %789 = vmatpush1.msra.mxu0 %v194
    %790 = vmatprep.subr.mxu0 %v197
    %791 = vmatpush1.msra.mxu0 %v196
    %792 = vmatprep.subr.mxu0 %v199
    %793 = vmatpush1.msra.mxu0 %v198
    %794 = vmatprep.subr.mxu0 %v201
    %795 = vmatpush1.msra.mxu0 %v200
    %796 = vmatprep.subr.mxu0 %v203
    %797 = vmatpush1.msra.mxu0 %v202
    %798 = vmatprep.subr.mxu0 %v205
    %799 = vmatpush1.msra.mxu0 %v204
    %800 = vmatprep.subr.mxu0 %v207
    %801 = vmatpush1.msra.mxu0 %v206
    %802 = vmatprep.subr.mxu0 %v209
    %803 = vmatpush1.msra.mxu0 %v208
    %804 = vmatprep.subr.mxu0 %v211
    %805 = vmatpush1.msra.mxu0 %v210
    %806 = vmatprep.subr.mxu0 %v213
    %807 = vmatpush1.msra.mxu0 %v212
    %808 = vmatprep.subr.mxu0 %v215
    %809 = vmatpush1.msra.mxu0 %v214
    %810 = vmatprep.subr.mxu0 %v217
    %811 = vmatpush1.msra.mxu0 %v216
    %812 = vmatprep.subr.mxu0 %v219
    %813 = vmatpush1.msra.mxu0 %v218
    %814 = vmatprep.subr.mxu0 %v221
    %815 = vmatpush1.msra.mxu0 %v220
    %816 = vmatprep.subr.mxu0 %v223
    %817 = vmatpush1.msra.mxu0 %v222
    %818 = vmatprep.subr.mxu0 %v225
    %819 = vmatpush1.msra.mxu0 %v224
    %820 = vmatprep.mubr.f32.mxu0 %v754
    %821 = vmatmul.mubr.f32.gmra.mrb[0].mxu0 %v753
    %v822 = vpop.f32.mrb[0].mxu0
    %v823 = vadd.f32 0.0, %v822
    %v824 = vpop.f32.mrb[0].mxu0
    %v825 = vadd.f32 0.0, %v824
    %826 = vdwg.mxu0
    %v827 = vmul.f32 %v753, %v823
    %v828 = vmul.f32 %v754, %v825
    %v829 = vmul.f32 %v827, %v827
    %v830 = vmul.f32 %v828, %v828
    %v831 = vsel %vm230, %v829, 0.0
    %v832 = vsel %vm230, %v830, 0.0
    %v833 = vadd.f32 %v831, %v832
    %834 = vadd.xlane.f32.xlu0 %v833
    %v835 = vpop.xlane.xlu0 %834
    %v836 = vrsqrt.pop %v835
    %v837 = vmul.f32 %v835, %v836
    %vm838 = vcmp.eq.f32.partialorder %v835, inf
    %v839 = vsel %vm838, %v835, %v837
    %vm840 = vcmp.eq.f32.partialorder %v835, 0.0
    %v841 = vand.u32 %v835, 2147483648
    %v842 = vsel %vm840, %v841, %v839
    %v843 = vrcp.pop %v842
    %v844 = vmul.f32 %v755, %v843
    %v845 = vmul.f32 %v844, %v753
    %v846 = vmul.f32 %v844, %v754
    %v847 = vadd.f32 %v748, %v845
    %v848 = vadd.f32 %v749, %v846
    %v849 = vsel %vm752, %v748, %v847
    %v850 = vsel %vm752, %v749, %v848
    %v853 = vcombine.low %v849, %v850
    %v855 = vunpack.c.l.s4 1983009808
    %v856 = vunpack.c.0.s8 %v855
    %v857 = vlaneseq
    %v858 = vshrl.u32 %v857, 7
    %v859 = vsub.s32 %v856, %v858
    %v860 = vrot.slane %v853, %v859
    %862 = vst [vmem:[%s4] sm:$0xf] %v860
    // Predicated region
    $region26: #{_lambda_.1} parent=1 // pred_check
      _
    $region27: #{_lambda_.1} parent=1 // pred_check_branch
      %864 = sbr.rel (0) target = $region29
    $region28: #{_lambda_.1} parent=1 // pred_region
      _
    $region29: #{_lambda_.1} parent=1 // pred_fallthru
      _
    // Predicated region
    $region30: #{_lambda_.1} parent=1 // pred_check
      _
    $region31: #{_lambda_.1} parent=1 // pred_check_branch
      %866 = sbr.rel (0) target = $region33
    $region32: #{_lambda_.1} parent=1 // pred_region
      _
    $region33: #{_lambda_.1} parent=1 // pred_fallthru
      _
    %867 = vsyncpa [#allocation3], 1
    %868 = vsyncpa [#allocation5], 1

</llo_original>
